<compile_context>
chip_gen: v7x
topology: tpu7x:2x2x1
jax: 0.10.0
libtpu: 0.0.40
codegen_flags: <defaults>
</compile_context>

<pallas_src>
import jax
import jax.numpy as jnp
from jax.experimental import pallas as pl
from jax.experimental.pallas import tpu as pltpu

GRAM_SIZE = 3
ALPHABET = 4                      # A, C, G, T
VOCAB = ALPHABET ** GRAM_SIZE     # 64 possible k-mers
EMBED_DIM = 32                    # word2vec vector_size (synthetic)


def _round_up(x, m):
    return (x + m - 1) // m * m


def _skipgram_kernel(ids_ref, emb_t_ref, out_ref):
    # ids_ref:   (N, 1, TB) int32 -- k-mer vocab ids; lane axis = sequence-in-tile, pad = -1
    # emb_t_ref: (D, Vp)    f32   -- transposed, vocab-padded embedding table (VMEM resident)
    # out_ref:   (D, TB)    f32   -- mean-pooled embeddings, one column per sequence
    n_kmers = ids_ref.shape[0]
    tb = ids_ref.shape[2]
    v_pad = emb_t_ref.shape[1]

    # Hoisted: vocab index along sublanes, replicated across the TB lane axis.
    vocab_iota = jax.lax.broadcasted_iota(jnp.int32, (v_pad, tb), 0)

    def body(n, counts):
        row = ids_ref[n]                                       # (1, TB) int32, dynamic leading idx
        onehot = (row == vocab_iota).astype(jnp.float32)       # (Vp, TB); pad ids (-1) match nothing
        return counts + onehot

    counts = jax.lax.fori_loop(
        0, n_kmers, body, jnp.zeros((v_pad, tb), jnp.float32))  # (Vp, TB)

    # Per-sequence number of real k-mers (0 for batch-padding columns); fold the
    # mean into the counts so the epilogue is a pure matmul + store.
    n_valid = jnp.sum(counts, axis=0, keepdims=True)            # (1, TB)
    counts = counts * (1.0 / jnp.maximum(n_valid, 1.0))

    # MXU: (D, Vp) @ (Vp, TB) -> (D, TB) == per-sequence mean of gathered rows.
    out_ref[...] = jnp.dot(emb_t_ref[...], counts,
                           preferred_element_type=jnp.float32)


def skipgram_embed(kmer_ids, emb_table):
    """kmer_ids: (B, N) int32 k-mer vocab ids; emb_table: (V, D) f32 -> (B, D) f32."""
    B, N = kmer_ids.shape
    V, D = emb_table.shape

    V_pad = _round_up(V, 128)                   # MXU contraction dim -> full 128 lanes
    TB = 128 if B >= 128 else _round_up(B, 8)   # batch tile (lane axis of ids / out)
    B_pad = _round_up(B, TB)
    grid = (B_pad // TB,)

    # Lane-dense id layout (N, 1, B_pad); batch-padding columns filled with -1.
    ids_p = jnp.full((B_pad, N), -1, dtype=jnp.int32).at[:B, :].set(
        kmer_ids.astype(jnp.int32))
    ids3 = ids_p.T.reshape(N, 1, B_pad)

    # Zero-pad vocab rows and transpose the table once on the XLA side.
    emb_p = jnp.zeros((V_pad, D), jnp.float32).at[:V, :].set(
        emb_table.astype(jnp.float32))
    emb_t = emb_p.T                             # (D, V_pad)

    out_t = pl.pallas_call(
        _skipgram_kernel,
        out_shape=jax.ShapeDtypeStruct((D, B_pad), jnp.float32),
        grid_spec=pltpu.PrefetchScalarGridSpec(
            num_scalar_prefetch=0,
            grid=grid,
            in_specs=[
                # this tile's k-mer ids: one (1, TB) lane-dense row per k-mer position
                pl.BlockSpec((N, 1, TB), lambda g: (0, 0, g)),
                # full embedding table; same block every step -> stays VMEM-resident
                pl.BlockSpec((D, V_pad), lambda g: (0, 0)),
            ],
            out_specs=pl.BlockSpec((D, TB), lambda g: (0, g)),
        ),
        compiler_params=pltpu.CompilerParams(
            dimension_semantics=("parallel",),   # batch tiles split across TCs on v7x
            vmem_limit_bytes=32 * 1024 * 1024,
        ),
    )(ids3, emb_t)

    return out_t.T[:B]                           # (B, D)


def seqs_to_kmer_ids(seq_tokens, gram_size=GRAM_SIZE, alphabet=ALPHABET):
    """Glue: break integer-encoded sequences (B, L) into k-mer vocab ids (B, N)."""
    _, L = seq_tokens.shape
    n = L - gram_size + 1
    ids = jnp.zeros((seq_tokens.shape[0], n), dtype=jnp.int32)
    for j in range(gram_size):
        ids = ids * alphabet + seq_tokens[:, j:j + n].astype(jnp.int32)
    return ids


if __name__ == "__main__":
    key = jax.random.PRNGKey(0)
    k_emb, k_seq = jax.random.split(key)

    B, L = 2, 16                                   # 2 sequences of length 16
    n_kmers = L - GRAM_SIZE + 1                    # 14 k-mers per sequence

    # Deterministic synthetic "word2vec" table (stands in for Word2Vec.load).
    emb_table = jax.random.normal(k_emb, (VOCAB, EMBED_DIM), dtype=jnp.float32) * 0.1

    # Integer-encoded DNA sequences (0..3 == A,C,G,T), the kernel-side stand-in
    # for the module's list-of-strings input.
    seq_tokens = jax.random.randint(k_seq, (B, L), 0, ALPHABET, dtype=jnp.int32)

    kmer_ids = seqs_to_kmer_ids(seq_tokens)        # (B, 14)

    out = skipgram_embed(kmer_ids, emb_table)
    out = jax.block_until_ready(out)

    # Pure-JAX reference of the PyTorch forward (gather -> transpose -> mean(dim=1)).
    ref = emb_table[kmer_ids].mean(axis=1)         # (B, D)
    assert out.shape == (B, EMBED_DIM)
    assert jnp.allclose(out, ref, atol=1e-5), "mismatch vs reference"

    print("KERNEL_OK")
</pallas_src>

<mosaic_0001>
module attributes {stable_mosaic.version = 11 : i64} {
  func.func @_skipgram_kernel(%arg0: i32, %arg1: memref<14x1x8xi32, #tpu.memory_space<vmem>>, %arg2: memref<32x128xf32, #tpu.memory_space<vmem>>, %arg3: memref<32x8xf32, #tpu.memory_space<vmem>>) attributes {dimension_semantics = [#tpu.dimension_semantics<parallel>], iteration_bounds = array<i64: 1>, scalar_prefetch = 0 : i64, scratch_operands = 0 : i64, tpu.core_type = #tpu.core_type<tc>, window_params = [{transform_indices = @transform_0, window_bounds = array<i64: 14, 1, 8>}, {pipeline_mode = #tpu.pipeline_mode<synchronous>, transform_indices = @transform_1, window_bounds = array<i64: 32, 128>}, {transform_indices = @transform_2, window_bounds = array<i64: 32, 8>}]} {
    %0 = tpu.iota {dimensions = array<i32: 0>} : vector<128x8xi32>
    %cst = arith.constant 0.000000e+00 : f32
    %1 = vector.broadcast %cst : f32 to vector<128x8xf32>
    %c0_i32 = arith.constant 0 : i32
    %c14_i32 = arith.constant 14 : i32
    %2 = arith.addi %c0_i32, %c14_i32 : i32
    %c1_i32 = arith.constant 1 : i32
    %3 = scf.for %arg4 = %c0_i32 to %2 step %c1_i32 iter_args(%arg5 = %1) -> (vector<128x8xf32>)  : i32 {
      %15 = arith.index_cast %arg4 : i32 to index
      %c0_8 = arith.constant 0 : index
      %c0_9 = arith.constant 0 : index
      %16 = vector.load %arg1[%15, %c0_8, %c0_9] : memref<14x1x8xi32, #tpu.memory_space<vmem>>, vector<1x1x8xi32>
      %17 = vector.shape_cast %16 : vector<1x1x8xi32> to vector<1x8xi32>
      %18 = vector.broadcast %17 : vector<1x8xi32> to vector<128x8xi32>
      %19 = arith.cmpi eq, %18, %0 : vector<128x8xi32>
      %20 = arith.extui %19 : vector<128x8xi1> to vector<128x8xi32>
      %21 = arith.sitofp %20 : vector<128x8xi32> to vector<128x8xf32>
      %22 = arith.addf %arg5, %21 : vector<128x8xf32>
      scf.yield %22 : vector<128x8xf32>
    }
    %c14_i32_0 = arith.constant 14 : i32
    %cst_1 = arith.constant dense<0.000000e+00> : vector<8xf32>
    %4 = vector.multi_reduction <add>, %3, %cst_1 [0] : vector<128x8xf32> to vector<8xf32>
    %5 = vector.shape_cast %4 : vector<8xf32> to vector<1x8xf32>
    %cst_2 = arith.constant 1.000000e+00 : f32
    %6 = vector.broadcast %cst_2 : f32 to vector<1x8xf32>
    %7 = arith.maximumf %5, %6 : vector<1x8xf32>
    %cst_3 = arith.constant 1.000000e+00 : f32
    %8 = vector.broadcast %cst_3 : f32 to vector<1x8xf32>
    %9 = arith.divf %8, %7 : vector<1x8xf32>
    %10 = vector.broadcast %9 : vector<1x8xf32> to vector<128x8xf32>
    %11 = arith.mulf %3, %10 : vector<128x8xf32>
    %c0 = arith.constant 0 : index
    %c0_4 = arith.constant 0 : index
    %12 = vector.load %arg2[%c0, %c0_4] : memref<32x128xf32, #tpu.memory_space<vmem>>, vector<32x128xf32>
    %cst_5 = arith.constant dense<0.000000e+00> : vector<32x8xf32>
    %13 = tpu.matmul %12, %11, %cst_5 {dimension_numbers = #tpu.dot_dimension_numbers<[1], [0], [0], [1], [0, 0, 1, 1], [], []>} : vector<32x128xf32>, vector<128x8xf32>, vector<32x8xf32> -> vector<32x8xf32>
    %c0_6 = arith.constant 0 : index
    %c0_7 = arith.constant 0 : index
    %14 = vector.load %arg3[%c0_6, %c0_7] : memref<32x8xf32, #tpu.memory_space<vmem>>, vector<32x8xf32>
    tpu.vector_store %arg3[%c0_6, %c0_7], %13 {strides = array<i32>} : memref<32x8xf32, #tpu.memory_space<vmem>>, vector<32x8xf32>,
    return
  }
  func.func @transform_0(%arg0: i32) -> (i32, i32, i32) {
    %c0_i32 = arith.constant 0 : i32
    %c0_i32_0 = arith.constant 0 : i32
    %c0_i32_1 = arith.constant 0 : i32
    return %c0_i32, %c0_i32_0, %arg0 : i32, i32, i32
  }
  func.func @transform_1(%arg0: i32) -> (i32, i32) {
    %c0_i32 = arith.constant 0 : i32
    %c0_i32_0 = arith.constant 0 : i32
    %c0_i32_1 = arith.constant 0 : i32
    return %c0_i32, %c0_i32_0 : i32, i32
  }
  func.func @transform_2(%arg0: i32) -> (i32, i32) {
    %c0_i32 = arith.constant 0 : i32
    %c0_i32_0 = arith.constant 0 : i32
    return %c0_i32, %arg0 : i32, i32
  }
}

</mosaic_0001>

<llo_original>
// kernel: tpu_custom_call.1
$region0: #{tpu_custom_call.1}
  #allocation0 [shape = 'u32[]', space=smem, size = 0x4, offset = 0x4, fixed_abs, tag = 'smem constant byte address 0x4 - core index']
  #allocation1 [shape = 'u32[144,128]{1,0:T(1,128)}', space=vmem, size = 0x12000, scoped, tag = 'internal scratch']
  %s0 = inlined_call_operand.vmem [shape: s32[14,1,8], index: 0, kind: input, shape index: {}]
  %s1 = inlined_call_operand.hbm [shape: f32[32,128], index: 1, kind: input, shape index: {}]
  %s2 = inlined_call_operand.vmem [shape: f32[32,8], index: 2, kind: output, shape index: {}]
  %s3 = sld [smem:[#allocation0]]
  $region29: #{tpu_custom_call.1} parent=0
    _
  %s5 = ssub.s32 1, %s3
  %s6 = scalar_select 0, %s5, %s3
  $region1: #{tpu_custom_call.1} parent=0
    #allocation2 [shape = 'u8[16384]{0}', space=vmem, size = 0x4000, scoped, tag = 'input window, operand 1, single buffered']
    #allocation3 [shape = 's32[1]{0}', space=sflag, size = 0x4, scoped, tag = 'scoped memory for tpu_custom_call.1']
    %7 = vsyncpa [#allocation3], 0
    // Predicated region
    $region2: #{tpu_custom_call.1} parent=1 // pred_check
      _
    $region3: #{tpu_custom_call.1} parent=1 // pred_check_branch
      %9 = sbr.rel (0) target = $region5
    $region4: #{tpu_custom_call.1} parent=1 // pred_region
      _
    $region5: #{tpu_custom_call.1} parent=1 // pred_fallthru
      _
    // Predicated region
    $region6: #{tpu_custom_call.1} parent=1 // pred_check
      _
    $region7: #{tpu_custom_call.1} parent=1 // pred_check_branch
      %11 = sbr.rel (0) target = $region9
    $region8: #{tpu_custom_call.1} parent=1 // pred_region
      %s13 = ssub.s32 512, 512
      %14 = vsyncadd [#allocation3], %s13
      %s15 = sshll.u32 [#allocation2], 4
      %s16 = int_to_ptr.vmem [resolvable:$true] %s15
      %21 = dma.hbm_to_vmem [thread:$0]  %s1, 512, %s16, [#allocation3], 128, 128, 8
    $region9: #{tpu_custom_call.1} parent=1 // pred_fallthru
      _
    // Predicated region
    $region10: #{tpu_custom_call.1} parent=1 // pred_check
      _
    $region11: #{tpu_custom_call.1} parent=1 // pred_check_branch
      %23 = sbr.rel (0) target = $region13
    $region12: #{tpu_custom_call.1} parent=1 // pred_region
      %24 = dma.done [#allocation3], 512
    $region13: #{tpu_custom_call.1} parent=1 // pred_fallthru
      _
    %v25 = vlaneseq
    %v26 = vshrl.u32 %v25, 7
    %v27 = vadd.s32 %v26, 8
    %v28 = vadd.s32 %v26, 16
    %v29 = vadd.s32 %v26, 24
    %v30 = vadd.s32 %v26, 32
    %v31 = vadd.s32 %v26, 40
    %v32 = vadd.s32 %v26, 48
    %v33 = vadd.s32 %v26, 56
    %v34 = vadd.s32 %v26, 64
    %v35 = vadd.s32 %v26, 72
    %v36 = vadd.s32 %v26, 80
    %v37 = vadd.s32 %v26, 88
    %v38 = vadd.s32 %v26, 96
    %v39 = vadd.s32 %v26, 104
    %v40 = vadd.s32 %v26, 112
    %v41 = vadd.s32 %v26, 120
    loop: start=0, step=1, limit=14
    $region14: #{tpu_custom_call.1} parent=1 // loop_pre_header
      _
    $region15: #{tpu_custom_call.1} parent=1 // loop_header
      %s43 = sphi 0, %s47
      %p44 = scmp.ge.s32.totalorder %s43, 14
      %v48 = vphi 0.0, %v118
      %v49 = vphi 0.0, %v119
      %v50 = vphi 0.0, %v120
      %v51 = vphi 0.0, %v121
      %v52 = vphi 0.0, %v122
      %v53 = vphi 0.0, %v123
      %v54 = vphi 0.0, %v124
      %v55 = vphi 0.0, %v125
      %v56 = vphi 0.0, %v126
      %v57 = vphi 0.0, %v127
      %v58 = vphi 0.0, %v128
      %v59 = vphi 0.0, %v129
      %v60 = vphi 0.0, %v130
      %v61 = vphi 0.0, %v131
      %v62 = vphi 0.0, %v132
      %v63 = vphi 0.0, %v133
    $region16: #{tpu_custom_call.1} parent=1 // loop_header_branch
      %46 = sbr.rel (%p44) target = $region20
    $region17: #{tpu_custom_call.1} parent=1 // loop_body
      %s64 = scalar_lea.vmem %s0, %s43
      %v65 = vld [vmem:[%s64] sm:$0x1]
      %v66 = vlaneseq
      %v67 = vshrl.u32 %v66, 7
      %v68 = vsub.s32 0, %v67
      %v69 = vrot.slane %v65, %v68
      %vm70 = vcmp.eq.s32.totalorder %v69, %v26
      %vm71 = vcmp.eq.s32.totalorder %v69, %v27
      %vm72 = vcmp.eq.s32.totalorder %v69, %v28
      %vm73 = vcmp.eq.s32.totalorder %v69, %v29
      %vm74 = vcmp.eq.s32.totalorder %v69, %v30
      %vm75 = vcmp.eq.s32.totalorder %v69, %v31
      %vm76 = vcmp.eq.s32.totalorder %v69, %v32
      %vm77 = vcmp.eq.s32.totalorder %v69, %v33
      %vm78 = vcmp.eq.s32.totalorder %v69, %v34
      %vm79 = vcmp.eq.s32.totalorder %v69, %v35
      %vm80 = vcmp.eq.s32.totalorder %v69, %v36
      %vm81 = vcmp.eq.s32.totalorder %v69, %v37
      %vm82 = vcmp.eq.s32.totalorder %v69, %v38
      %vm83 = vcmp.eq.s32.totalorder %v69, %v39
      %vm84 = vcmp.eq.s32.totalorder %v69, %v40
      %vm85 = vcmp.eq.s32.totalorder %v69, %v41
      %v86 = vsel %vm70, 1, 0
      %v87 = vsel %vm71, 1, 0
      %v88 = vsel %vm72, 1, 0
      %v89 = vsel %vm73, 1, 0
      %v90 = vsel %vm74, 1, 0
      %v91 = vsel %vm75, 1, 0
      %v92 = vsel %vm76, 1, 0
      %v93 = vsel %vm77, 1, 0
      %v94 = vsel %vm78, 1, 0
      %v95 = vsel %vm79, 1, 0
      %v96 = vsel %vm80, 1, 0
      %v97 = vsel %vm81, 1, 0
      %v98 = vsel %vm82, 1, 0
      %v99 = vsel %vm83, 1, 0
      %v100 = vsel %vm84, 1, 0
      %v101 = vsel %vm85, 1, 0
      %v102 = vcvt.s32.f32 %v86
      %v103 = vcvt.s32.f32 %v87
      %v104 = vcvt.s32.f32 %v88
      %v105 = vcvt.s32.f32 %v89
      %v106 = vcvt.s32.f32 %v90
      %v107 = vcvt.s32.f32 %v91
      %v108 = vcvt.s32.f32 %v92
      %v109 = vcvt.s32.f32 %v93
      %v110 = vcvt.s32.f32 %v94
      %v111 = vcvt.s32.f32 %v95
      %v112 = vcvt.s32.f32 %v96
      %v113 = vcvt.s32.f32 %v97
      %v114 = vcvt.s32.f32 %v98
      %v115 = vcvt.s32.f32 %v99
      %v116 = vcvt.s32.f32 %v100
      %v117 = vcvt.s32.f32 %v101
      %v118 = vadd.f32 %v48, %v102
      %v119 = vadd.f32 %v49, %v103
      %v120 = vadd.f32 %v50, %v104
      %v121 = vadd.f32 %v51, %v105
      %v122 = vadd.f32 %v52, %v106
      %v123 = vadd.f32 %v53, %v107
      %v124 = vadd.f32 %v54, %v108
      %v125 = vadd.f32 %v55, %v109
      %v126 = vadd.f32 %v56, %v110
      %v127 = vadd.f32 %v57, %v111
      %v128 = vadd.f32 %v58, %v112
      %v129 = vadd.f32 %v59, %v113
      %v130 = vadd.f32 %v60, %v114
      %v131 = vadd.f32 %v61, %v115
      %v132 = vadd.f32 %v62, %v116
      %v133 = vadd.f32 %v63, %v117
    $region18: #{tpu_custom_call.1} parent=1 // loop_footer
      %s47 = sadd.s32 1, %s43
    $region19: #{tpu_custom_call.1} parent=1 // loop_footer_branch
      %42 = sbr.rel target = $region15
    $region20: #{tpu_custom_call.1} parent=1 // loop_exit
      _
    %vm134 = vcmask 64512
    %v135 = vsel %vm134, %v48, 0.0
    %v136 = vsel %vm134, %v49, 0.0
    %v137 = vadd.f32 %v135, %v136
    %v138 = vsel %vm134, %v50, 0.0
    %v139 = vadd.f32 %v137, %v138
    %v140 = vsel %vm134, %v51, 0.0
    %v141 = vadd.f32 %v139, %v140
    %v142 = vsel %vm134, %v52, 0.0
    %v143 = vadd.f32 %v141, %v142
    %v144 = vsel %vm134, %v53, 0.0
    %v145 = vadd.f32 %v143, %v144
    %v146 = vsel %vm134, %v54, 0.0
    %v147 = vadd.f32 %v145, %v146
    %v148 = vsel %vm134, %v55, 0.0
    %v149 = vadd.f32 %v147, %v148
    %v150 = vsel %vm134, %v56, 0.0
    %v151 = vadd.f32 %v149, %v150
    %v152 = vsel %vm134, %v57, 0.0
    %v153 = vadd.f32 %v151, %v152
    %v154 = vsel %vm134, %v58, 0.0
    %v155 = vadd.f32 %v153, %v154
    %v156 = vsel %vm134, %v59, 0.0
    %v157 = vadd.f32 %v155, %v156
    %v158 = vsel %vm134, %v60, 0.0
    %v159 = vadd.f32 %v157, %v158
    %v160 = vsel %vm134, %v61, 0.0
    %v161 = vadd.f32 %v159, %v160
    %v162 = vsel %vm134, %v62, 0.0
    %v163 = vadd.f32 %v161, %v162
    %v164 = vsel %vm134, %v63, 0.0
    %v165 = vadd.f32 %v163, %v164
    %v166 = vrot.slane %v165, 4
    %v167 = vadd.f32 %v165, %v166
    %v168 = vrot.slane %v167, 2
    %v169 = vadd.f32 %v167, %v168
    %v170 = vrot.slane %v169, 1
    %v171 = vadd.f32 %v169, %v170
    %v172 = vmax.f32 %v171, 1.0
    %v173 = vrcp.pop %v172
    %v174 = vmul.f32 1.0, %v173
    %v175 = vmul.f32 %v48, %v174
    %v176 = vmul.f32 %v49, %v174
    %v177 = vmul.f32 %v50, %v174
    %v178 = vmul.f32 %v51, %v174
    %v179 = vmul.f32 %v52, %v174
    %v180 = vmul.f32 %v53, %v174
    %v181 = vmul.f32 %v54, %v174
    %v182 = vmul.f32 %v55, %v174
    %v183 = vmul.f32 %v56, %v174
    %v184 = vmul.f32 %v57, %v174
    %v185 = vmul.f32 %v58, %v174
    %v186 = vmul.f32 %v59, %v174
    %v187 = vmul.f32 %v60, %v174
    %v188 = vmul.f32 %v61, %v174
    %v189 = vmul.f32 %v62, %v174
    %v190 = vmul.f32 %v63, %v174
    %v191 = vld [vmem:[#allocation2] sm:$0xff]
    %v192 = vld [vmem:[#allocation2 + $0x8] sm:$0xff]
    %v193 = vld [vmem:[#allocation2 + $0x10] sm:$0xff]
    %v194 = vld [vmem:[#allocation2 + $0x18] sm:$0xff]
    %195 = vmatprep.subr.mxu0 0.0
    %196 = vmatpush1.msra.mxu0 %v175
    %197 = vmatprep.subr.mxu0 0.0
    %198 = vmatpush1.msra.mxu0 %v176
    %199 = vmatprep.subr.mxu0 0.0
    %200 = vmatpush1.msra.mxu0 %v177
    %201 = vmatprep.subr.mxu0 0.0
    %202 = vmatpush1.msra.mxu0 %v178
    %203 = vmatprep.subr.mxu0 0.0
    %204 = vmatpush1.msra.mxu0 %v179
    %205 = vmatprep.subr.mxu0 0.0
    %206 = vmatpush1.msra.mxu0 %v180
    %207 = vmatprep.subr.mxu0 0.0
    %208 = vmatpush1.msra.mxu0 %v181
    %209 = vmatprep.subr.mxu0 0.0
    %210 = vmatpush1.msra.mxu0 %v182
    %211 = vmatprep.subr.mxu0 0.0
    %212 = vmatpush1.msra.mxu0 %v183
    %213 = vmatprep.subr.mxu0 0.0
    %214 = vmatpush1.msra.mxu0 %v184
    %215 = vmatprep.subr.mxu0 0.0
    %216 = vmatpush1.msra.mxu0 %v185
    %217 = vmatprep.subr.mxu0 0.0
    %218 = vmatpush1.msra.mxu0 %v186
    %219 = vmatprep.subr.mxu0 0.0
    %220 = vmatpush1.msra.mxu0 %v187
    %221 = vmatprep.subr.mxu0 0.0
    %222 = vmatpush1.msra.mxu0 %v188
    %223 = vmatprep.subr.mxu0 0.0
    %224 = vmatpush1.msra.mxu0 %v189
    %225 = vmatprep.subr.mxu0 0.0
    %226 = vmatpush1.msra.mxu0 %v190
    %227 = vmatprep.subr.mxu0 0.0
    %228 = vmatpush1.msra.mxu0 0.0
    %229 = vmatprep.subr.mxu0 0.0
    %230 = vmatpush1.msra.mxu0 0.0
    %231 = vmatprep.subr.mxu0 0.0
    %232 = vmatpush1.msra.mxu0 0.0
    %233 = vmatprep.subr.mxu0 0.0
    %234 = vmatpush1.msra.mxu0 0.0
    %235 = vmatprep.subr.mxu0 0.0
    %236 = vmatpush1.msra.mxu0 0.0
    %237 = vmatprep.subr.mxu0 0.0
    %238 = vmatpush1.msra.mxu0 0.0
    %239 = vmatprep.subr.mxu0 0.0
    %240 = vmatpush1.msra.mxu0 0.0
    %241 = vmatprep.subr.mxu0 0.0
    %242 = vmatpush1.msra.mxu0 0.0
    %243 = vmatprep.subr.mxu0 0.0
    %244 = vmatpush1.msra.mxu0 0.0
    %245 = vmatprep.subr.mxu0 0.0
    %246 = vmatpush1.msra.mxu0 0.0
    %247 = vmatprep.subr.mxu0 0.0
    %248 = vmatpush1.msra.mxu0 0.0
    %249 = vmatprep.subr.mxu0 0.0
    %250 = vmatpush1.msra.mxu0 0.0
    %251 = vmatprep.subr.mxu0 0.0
    %252 = vmatpush1.msra.mxu0 0.0
    %253 = vmatprep.subr.mxu0 0.0
    %254 = vmatpush1.msra.mxu0 0.0
    %255 = vmatprep.subr.mxu0 0.0
    %256 = vmatpush1.msra.mxu0 0.0
    %257 = vmatprep.subr.mxu0 0.0
    %258 = vmatpush1.msra.mxu0 0.0
    %259 = vmatprep.mubr.f32.mxu0 0.0
    %260 = vmatmul.mubr.f32.gmra.mrb[0].mxu0 %v191
    %v261 = vpop.f32.mrb[0].mxu0
    %v262 = vadd.f32 0.0, %v261
    %v263 = vpop.f32.mrb[0].mxu0
    %264 = vmatprep.mubr.f32.mxu0 0.0
    %265 = vmatmul.mubr.f32.gmra.mrb[0].mxu0 %v192
    %v266 = vpop.f32.mrb[0].mxu0
    %v267 = vadd.f32 0.0, %v266
    %v268 = vpop.f32.mrb[0].mxu0
    %269 = vmatprep.mubr.f32.mxu0 0.0
    %270 = vmatmul.mubr.f32.gmra.mrb[0].mxu0 %v193
    %v271 = vpop.f32.mrb[0].mxu0
    %v272 = vadd.f32 0.0, %v271
    %v273 = vpop.f32.mrb[0].mxu0
    %274 = vmatprep.mubr.f32.mxu0 0.0
    %275 = vmatmul.mubr.f32.gmra.mrb[0].mxu0 %v194
    %v276 = vpop.f32.mrb[0].mxu0
    %v277 = vadd.f32 0.0, %v276
    %v278 = vpop.f32.mrb[0].mxu0
    %279 = vdwg.mxu0
    %280 = vst.msk [vmem:[%s2] sm:$0xff] %vm134, %v262
    %281 = vst.msk [vmem:[%s2 + $0x8] sm:$0xff] %vm134, %v267
    %282 = vst.msk [vmem:[%s2 + $0x10] sm:$0xff] %vm134, %v272
    %283 = vst.msk [vmem:[%s2 + $0x18] sm:$0xff] %vm134, %v277
    // Predicated region
    $region21: #{tpu_custom_call.1} parent=1 // pred_check
      _
    $region22: #{tpu_custom_call.1} parent=1 // pred_check_branch
      %285 = sbr.rel (0) target = $region24
    $region23: #{tpu_custom_call.1} parent=1 // pred_region
      _
    $region24: #{tpu_custom_call.1} parent=1 // pred_fallthru
      _
    // Predicated region
    $region25: #{tpu_custom_call.1} parent=1 // pred_check
      _
    $region26: #{tpu_custom_call.1} parent=1 // pred_check_branch
      %287 = sbr.rel (0) target = $region28
    $region27: #{tpu_custom_call.1} parent=1 // pred_region
      _
    $region28: #{tpu_custom_call.1} parent=1 // pred_fallthru
      _
    %288 = vsyncpa [#allocation3], 1

</llo_original>
